<compile_context>
chip_gen: v6e
topology: v6e:2x2x1
jax: 0.10.0
libtpu: 0.0.40
codegen_flags: <defaults>
</compile_context>

<pallas_src>
import functools
import math

import jax
import jax.numpy as jnp
from jax.experimental import pallas as pl
from jax.experimental.pallas import tpu as pltpu


def _cdiv(a, b):
    return -(-a // b)


def _round_up(a, m):
    return _cdiv(a, m) * m


def _secaware_kernel(x_ref, o_ref, *, num_fields, emb_dim, group_width):
    """x_ref / o_ref: (TB, L) lane-dense tiles, L = k * group_width."""
    F, D, FD = num_fields, emb_dim, group_width
    L = x_ref.shape[-1]

    xf = x_ref[...].astype(jnp.float32)          # all math in f32

    s_full = xf
    if L == FD:
        # One batch row per lane row: the F fields tile the axis exactly, so
        # the per-d field sum is the sum of the F cyclic lane shifts by j*D.
        for j in range(1, F):
            s_full = s_full + pltpu.roll(xf, j * D, axis=1)
    else:
        # k = L // FD batch rows packed per lane row.  A cyclic shift *within*
        # each FD-wide group is two full-axis rolls combined by a static lane
        # mask (XLU rolls + one VPU select; no relayout, no concat).
        lane = jax.lax.broadcasted_iota(jnp.int32, xf.shape, 1)
        local = lane % FD
        for j in range(1, F):
            s = j * D
            hi = pltpu.roll(xf, s, axis=1)            # correct where local >= s
            lo = pltpu.roll(xf, L - FD + s, axis=1)   # correct where local <  s
            s_full = s_full + jnp.where(local >= s, hi, lo)

    # out = x * (S - x), stored once, full lane width.
    o_ref[...] = (xf * (s_full - xf)).astype(o_ref.dtype)


def sec_aware_branch(x):
    """x: (B, F, D) -> (B, F*D), matching SecAwareBranch.forward."""
    B, F, D = x.shape
    FD = F * D
    itemsize = jnp.dtype(x.dtype).itemsize

    # ---- lane packing: make the lane extent a multiple of 128 when possible.
    if FD % 128 == 0:
        k = 1
    else:
        k = 128 // math.gcd(FD, 128)     # smallest k with (k * FD) % 128 == 0
        if k > 16 or B % k != 0:
            k = 1                        # padded-lane fallback (see TODO above)
    Bp = B // k
    L = FD * k
    x2 = x.reshape(Bp, L)                # free row-major reshape

    # ---- chip-aware VMEM limit and tile budget.
    try:
        cap = int(getattr(pltpu.get_tpu_info(), "vmem_capacity_bytes", 64 << 20))
    except Exception:
        cap = 64 << 20
    vmem_limit = int(min(cap * 5 // 8, 80 << 20))  # ~40 MiB v7x, 80 MiB v5e/v6e
    budget = (vmem_limit * 3) // 4                 # headroom for Mosaic scratch

    l_pad = _round_up(L, 128)
    # 2x double-buffered input + 2x output tiles (input dtype) plus ~5 f32
    # rows of in-kernel intermediates (xf, s_full, hi, lo, result).
    per_row = 4 * l_pad * itemsize + 5 * l_pad * 4
    tb_max = max(8, (budget // per_row) // 8 * 8)

    if Bp <= tb_max:
        tb = Bp                          # single full-extent block
    else:
        n_steps = _cdiv(Bp, tb_max)
        if n_steps % 2 == 1:
            n_steps += 1                 # even, near-balanced steps (v7x 2 TCs)
        tb = min(tb_max, _round_up(_cdiv(Bp, n_steps), 8))
    grid = (_cdiv(Bp, tb),)

    kernel = functools.partial(
        _secaware_kernel, num_fields=F, emb_dim=D, group_width=FD)

    out = pl.pallas_call(
        kernel,
        out_shape=jax.ShapeDtypeStruct((Bp, L), x.dtype),
        grid_spec=pltpu.PrefetchScalarGridSpec(
            num_scalar_prefetch=0,
            grid=grid,
            in_specs=[pl.BlockSpec((tb, L), lambda b: (b, 0))],
            out_specs=pl.BlockSpec((tb, L), lambda b: (b, 0)),
        ),
        compiler_params=pltpu.CompilerParams(
            dimension_semantics=("parallel",),
            vmem_limit_bytes=vmem_limit,
        ),
        cost_estimate=pl.CostEstimate(
            flops=(F + 1) * B * FD,                  # (F-1) adds + sub + mul
            transcendentals=0,
            bytes_accessed=2 * B * FD * itemsize,    # read x, write out
        ),
    )(x2)
    return out.reshape(B, FD)


def _reference(x):
    # Pure-JAX mirror of the PyTorch module.
    B, F, D = x.shape
    fm_input = jnp.broadcast_to(x[:, None, :, :], (B, F, F, D))
    square = x ** 2
    cross_term = jnp.sum(fm_input * x[:, :, None, :], axis=2) - square
    return cross_term.reshape(B, -1)


if __name__ == "__main__":
    key = jax.random.PRNGKey(0)
    B, F, D = 2, 4, 16
    x = jax.random.normal(key, (B, F, D), dtype=jnp.float32)

    out = jax.block_until_ready(sec_aware_branch(x))
    ref = _reference(x)

    assert out.shape == (B, F * D), out.shape
    assert jnp.allclose(out, ref, atol=1e-5, rtol=1e-5), float(
        jnp.max(jnp.abs(out - ref)))

    print("KERNEL_OK")
</pallas_src>

<mosaic_0001>
module attributes {stable_mosaic.version = 11 : i64} {
  func.func @_secaware_kernel(%arg0: i32, %arg1: memref<1x128xf32, #tpu.memory_space<vmem>>, %arg2: memref<1x128xf32, #tpu.memory_space<vmem>>) attributes {dimension_semantics = [#tpu.dimension_semantics<parallel>], iteration_bounds = array<i64: 1>, scalar_prefetch = 0 : i64, scratch_operands = 0 : i64, tpu.core_type = #tpu.core_type<tc>, window_params = [{transform_indices = @transform_0, window_bounds = array<i64: 1, 128>}, {transform_indices = @transform_1, window_bounds = array<i64: 1, 128>}]} {
    %c0 = arith.constant 0 : index
    %c0_0 = arith.constant 0 : index
    %0 = vector.load %arg1[%c0, %c0_0] : memref<1x128xf32, #tpu.memory_space<vmem>>, vector<1x128xf32>
    %1 = tpu.iota {dimensions = array<i32: 1>} : vector<1x128xi32>
    %c64_i32 = arith.constant 64 : i32
    %c0_i32 = arith.constant 0 : i32
    %2 = arith.cmpi eq, %c64_i32, %c0_i32 : i32
    %c1_i32 = arith.constant 1 : i32
    %3 = arith.select %2, %c1_i32, %c64_i32 : i32
    %4 = vector.broadcast %3 : i32 to vector<1x128xi32>
    %5 = arith.remsi %1, %4 : vector<1x128xi32>
    %c0_i32_1 = arith.constant 0 : i32
    %6 = vector.broadcast %c0_i32_1 : i32 to vector<1x128xi32>
    %7 = arith.cmpi ne, %5, %6 : vector<1x128xi32>
    %c0_i32_2 = arith.constant 0 : i32
    %8 = vector.broadcast %c0_i32_2 : i32 to vector<1x128xi32>
    %9 = arith.cmpi slt, %5, %8 : vector<1x128xi32>
    %c0_i32_3 = arith.constant 0 : i32
    %10 = arith.cmpi slt, %3, %c0_i32_3 : i32
    %11 = vector.broadcast %10 : i1 to vector<1x128xi1>
    %12 = vector.broadcast %11 : vector<1x128xi1> to vector<1x128xi1>
    %13 = arith.xori %9, %12 : vector<1x128xi1>
    %14 = arith.andi %13, %7 : vector<1x128xi1>
    %15 = vector.broadcast %3 : i32 to vector<1x128xi32>
    %16 = arith.addi %5, %15 : vector<1x128xi32>
    %17 = arith.select %14, %16, %5 : vector<1x128xi1>, vector<1x128xi32>
    %c16_i32 = arith.constant 16 : i32
    %18 = tpu.dynamic_rotate %0 by %c16_i32 dim 1 : vector<1x128xf32>, i32 -> vector<1x128xf32>
    %c80_i32 = arith.constant 80 : i32
    %19 = tpu.dynamic_rotate %0 by %c80_i32 dim 1 : vector<1x128xf32>, i32 -> vector<1x128xf32>
    %c16_i32_4 = arith.constant 16 : i32
    %20 = vector.broadcast %c16_i32_4 : i32 to vector<1x128xi32>
    %21 = arith.cmpi sge, %17, %20 : vector<1x128xi32>
    %22 = arith.select %21, %18, %19 : vector<1x128xi1>, vector<1x128xf32>
    %23 = arith.addf %0, %22 : vector<1x128xf32>
    %c32_i32 = arith.constant 32 : i32
    %24 = tpu.dynamic_rotate %0 by %c32_i32 dim 1 : vector<1x128xf32>, i32 -> vector<1x128xf32>
    %c96_i32 = arith.constant 96 : i32
    %25 = tpu.dynamic_rotate %0 by %c96_i32 dim 1 : vector<1x128xf32>, i32 -> vector<1x128xf32>
    %c32_i32_5 = arith.constant 32 : i32
    %26 = vector.broadcast %c32_i32_5 : i32 to vector<1x128xi32>
    %27 = arith.cmpi sge, %17, %26 : vector<1x128xi32>
    %28 = arith.select %27, %24, %25 : vector<1x128xi1>, vector<1x128xf32>
    %29 = arith.addf %23, %28 : vector<1x128xf32>
    %c48_i32 = arith.constant 48 : i32
    %30 = tpu.dynamic_rotate %0 by %c48_i32 dim 1 : vector<1x128xf32>, i32 -> vector<1x128xf32>
    %c112_i32 = arith.constant 112 : i32
    %31 = tpu.dynamic_rotate %0 by %c112_i32 dim 1 : vector<1x128xf32>, i32 -> vector<1x128xf32>
    %c48_i32_6 = arith.constant 48 : i32
    %32 = vector.broadcast %c48_i32_6 : i32 to vector<1x128xi32>
    %33 = arith.cmpi sge, %17, %32 : vector<1x128xi32>
    %34 = arith.select %33, %30, %31 : vector<1x128xi1>, vector<1x128xf32>
    %35 = arith.addf %29, %34 : vector<1x128xf32>
    %36 = arith.subf %35, %0 : vector<1x128xf32>
    %37 = arith.mulf %0, %36 : vector<1x128xf32>
    %c0_7 = arith.constant 0 : index
    %c0_8 = arith.constant 0 : index
    %38 = vector.load %arg2[%c0_7, %c0_8] : memref<1x128xf32, #tpu.memory_space<vmem>>, vector<1x128xf32>
    tpu.vector_store %arg2[%c0_7, %c0_8], %37 {strides = array<i32>} : memref<1x128xf32, #tpu.memory_space<vmem>>, vector<1x128xf32>,
    return
  }
  func.func @transform_0(%arg0: i32) -> (i32, i32) {
    %c0_i32 = arith.constant 0 : i32
    %c0_i32_0 = arith.constant 0 : i32
    return %arg0, %c0_i32 : i32, i32
  }
  func.func @transform_1(%arg0: i32) -> (i32, i32) {
    %c0_i32 = arith.constant 0 : i32
    %c0_i32_0 = arith.constant 0 : i32
    return %arg0, %c0_i32 : i32, i32
  }
}

</mosaic_0001>

<llo_original>
// kernel: tpu_custom_call.1
$region0: #{tpu_custom_call.1}
  #allocation0 [shape = 'u32[]', space=smem, size = 0x4, offset = 0x4, fixed_abs, tag = 'smem constant byte address 0x4 - core index']
  #allocation1 [shape = 'u32[144,128]{1,0:T(1,128)}', space=vmem, size = 0x12000, scoped, tag = 'internal scratch']
  %s0 = inlined_call_operand.hbm [shape: f32[1,128], index: 0, kind: input, shape index: {}]
  %s1 = inlined_call_operand.hbm [shape: f32[1,128], index: 1, kind: output, shape index: {}]
  %s2 = sld [smem:[#allocation0]]
  $region18: #{tpu_custom_call.1} parent=0
    _
  %s4 = ssub.s32 1, %s2
  %s5 = scalar_select 0, %s4, %s2
  $region1: #{tpu_custom_call.1} parent=0
    #allocation2 [shape = 'u8[512]{0}', space=vmem, size = 0x400, scoped, tag = 'input window, operand 0, single buffered']
    #allocation3 [shape = 's32[1]{0}', space=sflag, size = 0x4, scoped, tag = 'scoped memory for tpu_custom_call.1']
    #allocation4 [shape = 's32[1]{0}', space=sflag, size = 0x4, scoped, tag = 'scoped memory for tpu_custom_call.1']
    #allocation5 [shape = 'u8[512]{0}', space=vmem, size = 0x400, scoped, tag = 'output window, operand 0, single buffered']
    %6 = vsyncpa [#allocation3], 0
    %7 = vsyncpa [#allocation4], 0
    // Predicated region
    $region2: #{tpu_custom_call.1} parent=1 // pred_check
      _
    $region3: #{tpu_custom_call.1} parent=1 // pred_check_branch
      %9 = sbr.rel (0) target = $region5
    $region4: #{tpu_custom_call.1} parent=1 // pred_region
      %s11 = ssub.s32 16, 16
      %12 = vsyncadd [#allocation3], %s11
      %s14 = sshll.u32 [#allocation2], 4
      %s15 = int_to_ptr.vmem [resolvable:$true] %s14
      %17 = dma.hbm_to_vmem [thread:$0]  %s0, 16, %s15, [#allocation3]
    $region5: #{tpu_custom_call.1} parent=1 // pred_fallthru
      _
    // Predicated region
    $region6: #{tpu_custom_call.1} parent=1 // pred_check
      _
    $region7: #{tpu_custom_call.1} parent=1 // pred_check_branch
      %19 = sbr.rel (0) target = $region9
    $region8: #{tpu_custom_call.1} parent=1 // pred_region
      %20 = dma.done [#allocation3], 16
    $region9: #{tpu_custom_call.1} parent=1 // pred_fallthru
      _
    %v21 = vld [vmem:[#allocation2] sm:$0x1]
    %v22 = vlaneseq
    %v23 = vand.u32 %v22, 127
    %vm24 = vcmp.lt.s32.totalorder %v23, 0
    %v25 = vsub.s32 0, %v23
    %v26 = vsel %vm24, %v25, %v23
    %v27 = vshrl.u32 %v26, 6
    %v28 = vand.u32 %v26, 63
    %v29 = vsub.s32 0, %v28
    %v30 = vsel %vm24, %v29, %v28
    %vm31 = vcmp.ne.s32.totalorder %v30, 0
    %vm32 = vcmp.lt.s32.totalorder %v30, 0
    %vm33 = vmand %vm32, %vm31
    %v34 = vadd.s32 %v30, 64
    %v35 = vsel %vm33, %v34, %v30
    %36 = vrot.lane.b32.xlu0 %v21, 16
    %v37 = vpop.permute.xlu0 %36
    %38 = vrot.lane.b32.xlu0 %v21, 80
    %v39 = vpop.permute.xlu0 %38
    %vm40 = vcmp.ge.s32.totalorder %v35, 16
    %v41 = vsel %vm40, %v37, %v39
    %v42 = vadd.f32 %v21, %v41
    %43 = vrot.lane.b32.xlu0 %v21, 32
    %v44 = vpop.permute.xlu0 %43
    %45 = vrot.lane.b32.xlu0 %v21, 96
    %v46 = vpop.permute.xlu0 %45
    %vm47 = vcmp.ge.s32.totalorder %v35, 32
    %v48 = vsel %vm47, %v44, %v46
    %v49 = vadd.f32 %v42, %v48
    %50 = vrot.lane.b32.xlu0 %v21, 48
    %v51 = vpop.permute.xlu0 %50
    %52 = vrot.lane.b32.xlu0 %v21, 112
    %v53 = vpop.permute.xlu0 %52
    %vm54 = vcmp.ge.s32.totalorder %v35, 48
    %v55 = vsel %vm54, %v51, %v53
    %v56 = vadd.f32 %v49, %v55
    %v57 = vsub.f32 %v56, %v21
    %v58 = vmul.f32 %v21, %v57
    %59 = vst [vmem:[#allocation5] sm:$0x1] %v58
    // Predicated region
    $region10: #{tpu_custom_call.1} parent=1 // pred_check
      _
    $region11: #{tpu_custom_call.1} parent=1 // pred_check_branch
      %61 = sbr.rel (0) target = $region13
    $region12: #{tpu_custom_call.1} parent=1 // pred_region
      %s63 = ssub.s32 16, 16
      %64 = vsyncadd [#allocation4], %s63
      %s66 = sshll.u32 [#allocation5], 4
      %s67 = int_to_ptr.vmem [resolvable:$true] %s66
      %69 = dma.vmem_to_hbm [thread:$0]  %s67, 16, %s1, [#allocation4]
    $region13: #{tpu_custom_call.1} parent=1 // pred_fallthru
      _
    // Predicated region
    $region14: #{tpu_custom_call.1} parent=1 // pred_check
      _
    $region15: #{tpu_custom_call.1} parent=1 // pred_check_branch
      %71 = sbr.rel (0) target = $region17
    $region16: #{tpu_custom_call.1} parent=1 // pred_region
      %72 = dma.done [#allocation4], 16
    $region17: #{tpu_custom_call.1} parent=1 // pred_fallthru
      _
    %73 = vsyncpa [#allocation3], 1
    %74 = vsyncpa [#allocation4], 1

</llo_original>
